<compile_context>
chip_gen: v6e
topology: v6e:2x2x1
jax: 0.10.0
libtpu: 0.0.40
codegen_flags: <defaults>
</compile_context>

<pallas_src>
import math
import functools

import jax
import jax.numpy as jnp
from jax import lax
from jax.experimental import pallas as pl
from jax.experimental.pallas import tpu as pltpu

MXU_DTYPE = jnp.bfloat16   # MXU operand dtype (weights stored in this dtype)


# ---------------------------- tiling helpers ----------------------------

def _row_tile(m, cap=256):
    # second-to-last (sublane) dim: multiple of 8 or full
    if m % 8 != 0:
        return m
    t = min(m, cap)
    while m % t:
        t -= 8
    return t


def _lane_tile(n, cap=512):
    # last (lane) dim: multiple of 128 or full
    if n % 128 != 0:
        return n
    t = min(n, cap)
    while n % t:
        t -= 128
    return t


# ---------------------------- Pallas kernels ----------------------------

def _matmul_kernel(x_ref, w_ref, o_ref, acc_ref):
    """Tiled matmul with f32 VMEM accumulator; bf16 MXU operands."""
    @pl.when(pl.program_id(2) == 0)
    def _():
        acc_ref[...] = jnp.zeros_like(acc_ref)

    acc_ref[...] += jnp.dot(x_ref[...].astype(w_ref.dtype), w_ref[...],
                            preferred_element_type=jnp.float32)

    @pl.when(pl.program_id(2) == pl.num_programs(2) - 1)
    def _():
        o_ref[...] = acc_ref[...].astype(o_ref.dtype)


def _attn_addnorm_kernel(nh, d, scale, vl_ref, qkv_ref, x_ref, wo_ref,
                         g_ref, b_ref, o_ref, attn_ref):
    """Per-batch: multi-head attention + W_o projection + residual + LayerNorm.

    vl_ref: (B,) int32 valid lengths in SMEM (scalar prefetch).
    qkv_ref: (1, T, 3H) fused Q|K|V projection.  x_ref: (1, T, H) residual.
    attn_ref: (T, H) f32 VMEM scratch holding the merged per-head context.
    """
    b = pl.program_id(0)
    T = qkv_ref.shape[1]
    H = nh * d
    cdt = wo_ref.dtype                      # MXU compute dtype (bf16)

    # Mask built in-kernel from valid_lens (no HBM bias stream).
    vl = vl_ref[b]
    kidx = lax.broadcasted_iota(jnp.int32, (T, T), 1)
    bias = jnp.where(kidx < vl, 0.0, -1e6).astype(jnp.float32)

    qkv = qkv_ref[0]                        # (T, 3H)
    for h in range(nh):                     # static unroll over heads
        q_h = qkv[:, h * d:(h + 1) * d].astype(cdt)
        k_h = qkv[:, H + h * d:H + (h + 1) * d].astype(cdt)
        v_h = qkv[:, 2 * H + h * d:2 * H + (h + 1) * d].astype(cdt)
        # contract last dims of q and k directly (no explicit transpose)
        s = lax.dot_general(q_h, k_h, (((1,), (1,)), ((), ())),
                            preferred_element_type=jnp.float32)
        s = s * scale + bias
        s = s - jnp.max(s, axis=-1, keepdims=True)
        p = jnp.exp(s)
        p = p * pl.reciprocal(jnp.sum(p, axis=-1, keepdims=True), approx=True)
        # dropout on attention weights treated as identity (eval mode)
        attn_ref[:, h * d:(h + 1) * d] = jnp.dot(
            p.astype(cdt), v_h, preferred_element_type=jnp.float32)

    proj = jnp.dot(attn_ref[...].astype(cdt), wo_ref[...],
                   preferred_element_type=jnp.float32)
    s = proj + x_ref[0].astype(jnp.float32)
    mean = jnp.mean(s, axis=-1, keepdims=True)
    var = jnp.mean((s - mean) ** 2, axis=-1, keepdims=True)
    o_ref[0] = ((s - mean) * lax.rsqrt(var + 1e-5)
                * g_ref[...] + b_ref[...]).astype(o_ref.dtype)


def _ffn_addnorm_kernel(x_ref, w1_ref, b1_ref, w2_ref, b2_ref,
                        g_ref, bb_ref, o_ref):
    """Row-tile: dense1 + ReLU + dense2 + residual + LayerNorm, fully fused."""
    x = x_ref[...]
    h = jnp.dot(x.astype(w1_ref.dtype), w1_ref[...],
                preferred_element_type=jnp.float32) + b1_ref[...]
    h = jnp.maximum(h, 0.0)
    y = jnp.dot(h.astype(w2_ref.dtype), w2_ref[...],
                preferred_element_type=jnp.float32) + b2_ref[...]
    s = y + x.astype(jnp.float32)
    mean = jnp.mean(s, axis=-1, keepdims=True)
    var = jnp.mean((s - mean) ** 2, axis=-1, keepdims=True)
    o_ref[...] = ((s - mean) * lax.rsqrt(var + 1e-5)
                  * g_ref[...] + bb_ref[...]).astype(o_ref.dtype)


# ---------------------------- Pallas wrappers ----------------------------

def pallas_matmul(x, w):
    M, K = x.shape
    _, N = w.shape
    tm, tn, tk = _row_tile(M), _lane_tile(N), _lane_tile(K)
    grid = (M // tm, N // tn, K // tk)
    return pl.pallas_call(
        _matmul_kernel,
        out_shape=jax.ShapeDtypeStruct((M, N), x.dtype),
        grid_spec=pltpu.PrefetchScalarGridSpec(
            num_scalar_prefetch=0,
            grid=grid,
            in_specs=[pl.BlockSpec((tm, tk), lambda i, j, k: (i, k)),
                      pl.BlockSpec((tk, tn), lambda i, j, k: (k, j))],
            out_specs=pl.BlockSpec((tm, tn), lambda i, j, k: (i, j)),
            scratch_shapes=[pltpu.VMEM((tm, tn), jnp.float32)]),
        compiler_params=pltpu.CompilerParams(
            dimension_semantics=("parallel", "parallel", "arbitrary")),
    )(x, w)


def pallas_attention_addnorm(qkv, X, valid_lens, W_o, gamma, beta, num_heads):
    B, T, H3 = qkv.shape
    H = X.shape[-1]
    d = H // num_heads
    kern = functools.partial(_attn_addnorm_kernel, num_heads, d,
                             1.0 / math.sqrt(d))
    return pl.pallas_call(
        kern,
        out_shape=jax.ShapeDtypeStruct((B, T, H), X.dtype),
        grid_spec=pltpu.PrefetchScalarGridSpec(
            num_scalar_prefetch=1,                # valid_lens -> SMEM
            grid=(B,),
            in_specs=[pl.BlockSpec((1, T, H3), lambda b, vl: (b, 0, 0)),
                      pl.BlockSpec((1, T, H), lambda b, vl: (b, 0, 0)),
                      pl.BlockSpec((H, H), lambda b, vl: (0, 0)),
                      pl.BlockSpec((1, H), lambda b, vl: (0, 0)),
                      pl.BlockSpec((1, H), lambda b, vl: (0, 0))],
            out_specs=pl.BlockSpec((1, T, H), lambda b, vl: (b, 0, 0)),
            scratch_shapes=[pltpu.VMEM((T, H), jnp.float32)]),
        compiler_params=pltpu.CompilerParams(
            dimension_semantics=("parallel",)),
    )(valid_lens, qkv, X, W_o, gamma.reshape(1, H), beta.reshape(1, H))


def pallas_ffn_addnorm(x, w1, b1, w2, b2, gamma, beta):
    M, H = x.shape
    F = w1.shape[1]
    tm = _row_tile(M)
    return pl.pallas_call(
        _ffn_addnorm_kernel,
        out_shape=jax.ShapeDtypeStruct((M, H), x.dtype),
        grid_spec=pltpu.PrefetchScalarGridSpec(
            num_scalar_prefetch=0,
            grid=(M // tm,),
            in_specs=[pl.BlockSpec((tm, H), lambda i: (i, 0)),
                      pl.BlockSpec((H, F), lambda i: (0, 0)),
                      pl.BlockSpec((1, F), lambda i: (0, 0)),
                      pl.BlockSpec((F, H), lambda i: (0, 0)),
                      pl.BlockSpec((1, H), lambda i: (0, 0)),
                      pl.BlockSpec((1, H), lambda i: (0, 0)),
                      pl.BlockSpec((1, H), lambda i: (0, 0))],
            out_specs=pl.BlockSpec((tm, H), lambda i: (i, 0))),
        compiler_params=pltpu.CompilerParams(
            dimension_semantics=("parallel",)),
    )(x, w1, b1.reshape(1, F), w2, b2.reshape(1, H),
      gamma.reshape(1, H), beta.reshape(1, H))


# ---------------------------- Encoder block forward ----------------------------

def transformer_encoder_block(params, X, valid_lens, num_heads):
    B, T, H = X.shape
    if valid_lens is None:
        valid_lens = jnp.full((B,), T, dtype=jnp.int32)
    valid_lens = valid_lens.astype(jnp.int32)
    # TODO(synk): 2-D (per-query) valid_lens path of d2l masked_softmax not implemented.

    # 1) fused Q|K|V projection (single tiled matmul).
    qkv = pallas_matmul(X.reshape(B * T, H), params["W_qkv"])          # (B*T, 3H)
    # 2) attention + W_o + residual + LayerNorm (one kernel per batch).
    Y = pallas_attention_addnorm(qkv.reshape(B, T, 3 * H), X, valid_lens,
                                 params["W_o"], params["ln1_gamma"],
                                 params["ln1_beta"], num_heads)
    # 3) FFN + residual + LayerNorm (one fused kernel).
    out = pallas_ffn_addnorm(Y.reshape(B * T, H),
                             params["ffn_w1"], params["ffn_b1"],
                             params["ffn_w2"], params["ffn_b2"],
                             params["ln2_gamma"], params["ln2_beta"])
    return out.reshape(B, T, H)


# ---------------------------- Pure-JAX reference ----------------------------

def reference_forward(params, X, valid_lens, num_heads):
    B, T, H = X.shape
    d = H // num_heads
    f32 = jnp.float32
    W_qkv = params["W_qkv"].astype(f32)
    W_o = params["W_o"].astype(f32)

    qkv = (X.reshape(B * T, H) @ W_qkv).reshape(B, T, 3 * H)

    def split(z):
        return z.reshape(B, T, num_heads, d).transpose(0, 2, 1, 3)

    q, k, v = split(qkv[..., :H]), split(qkv[..., H:2 * H]), split(qkv[..., 2 * H:])
    scores = jnp.einsum("bhqd,bhkd->bhqk", q, k) / math.sqrt(d)
    mask = jnp.arange(T)[None, :] < valid_lens[:, None]                # (B, T)
    scores = jnp.where(mask[:, None, None, :], scores, -1e6)
    p = jax.nn.softmax(scores, axis=-1)
    o = jnp.einsum("bhqk,bhkd->bhqd", p, v).transpose(0, 2, 1, 3).reshape(B, T, H)

    def layer_norm(s, g, b):
        m = s.mean(-1, keepdims=True)
        var = ((s - m) ** 2).mean(-1, keepdims=True)
        return (s - m) * lax.rsqrt(var + 1e-5) * g + b

    Y = layer_norm(o @ W_o + X, params["ln1_gamma"], params["ln1_beta"])
    hdn = jnp.maximum(Y @ params["ffn_w1"].astype(f32) + params["ffn_b1"], 0.0)
    f = hdn @ params["ffn_w2"].astype(f32) + params["ffn_b2"]
    return layer_norm(f + Y, params["ln2_gamma"], params["ln2_beta"])


# ---------------------------- Deterministic init ----------------------------

def init_params(key, num_hiddens, ffn_num_hiddens):
    H, F = num_hiddens, ffn_num_hiddens
    ks = jax.random.split(key, 8)

    def dense(k, fi, fo):
        return jax.random.normal(k, (fi, fo), jnp.float32) * 0.02

    W_q, W_k, W_v = dense(ks[0], H, H), dense(ks[1], H, H), dense(ks[2], H, H)
    return {
        "W_qkv": jnp.concatenate([W_q, W_k, W_v], axis=1).astype(MXU_DTYPE),
        "W_o": dense(ks[3], H, H).astype(MXU_DTYPE),
        "ln1_gamma": jnp.ones((H,), jnp.float32),
        "ln1_beta": jnp.zeros((H,), jnp.float32),
        "ffn_w1": dense(ks[4], H, F).astype(MXU_DTYPE),
        "ffn_b1": jax.random.normal(ks[5], (F,), jnp.float32) * 0.02,
        "ffn_w2": dense(ks[6], F, H).astype(MXU_DTYPE),
        "ffn_b2": jax.random.normal(ks[7], (H,), jnp.float32) * 0.02,
        "ln2_gamma": jnp.ones((H,), jnp.float32),
        "ln2_beta": jnp.zeros((H,), jnp.float32),
    }


# ---------------------------- Main ----------------------------

if __name__ == "__main__":
    B, T, H = 2, 8, 32
    ffn_num_hiddens, num_heads = 64, 4
    # dropout treated as identity (eval mode)

    key = jax.random.PRNGKey(0)
    k_params, k_x = jax.random.split(key)
    params = init_params(k_params, H, ffn_num_hiddens)
    X = jax.random.normal(k_x, (B, T, H), jnp.float32)
    valid_lens = jnp.array([T, 5], dtype=jnp.int32)

    out = transformer_encoder_block(params, X, valid_lens, num_heads)
    jax.block_until_ready(out)

    assert out.shape == (B, T, H)
    assert bool(jnp.all(jnp.isfinite(out)))

    ref = reference_forward(params, X, valid_lens, num_heads)
    max_err = float(jnp.max(jnp.abs(out - ref)))
    assert max_err < 1e-1, f"max abs error {max_err}"

    print("KERNEL_OK")
</pallas_src>

<mosaic_0001>
module attributes {stable_mosaic.version = 11 : i64} {
  func.func @_matmul_kernel(%arg0: i32, %arg1: i32, %arg2: i32, %arg3: memref<16x32xf32, #tpu.memory_space<vmem>>, %arg4: memref<32x96xbf16, #tpu.memory_space<vmem>>, %arg5: memref<16x96xf32, #tpu.memory_space<vmem>>, %arg6: memref<16x96xf32, #tpu.memory_space<vmem>>) attributes {dimension_semantics = [#tpu.dimension_semantics<parallel>, #tpu.dimension_semantics<parallel>, #tpu.dimension_semantics<arbitrary>], iteration_bounds = array<i64: 1, 1, 1>, scalar_prefetch = 0 : i64, scratch_operands = 1 : i64, tpu.core_type = #tpu.core_type<tc>, window_params = [{transform_indices = @transform_0, window_bounds = array<i64: 16, 32>}, {transform_indices = @transform_1, window_bounds = array<i64: 32, 96>}, {transform_indices = @transform_2, window_bounds = array<i64: 16, 96>}]} {
    %c0_i32 = arith.constant 0 : i32
    %0 = arith.cmpi eq, %arg2, %c0_i32 : i32
    %1 = arith.extui %0 : i1 to i32
    %c0_i32_0 = arith.constant 0 : i32
    %2 = arith.cmpi ne, %1, %c0_i32_0 : i32
    scf.if %2 {
      %cst_10 = arith.constant 0.000000e+00 : f32
      %13 = vector.broadcast %cst_10 : f32 to vector<16x96xf32>
      %c0_11 = arith.constant 0 : index
      %c0_12 = arith.constant 0 : index
      %14 = vector.load %arg6[%c0_11, %c0_12] : memref<16x96xf32, #tpu.memory_space<vmem>>, vector<16x96xf32>
      tpu.vector_store %arg6[%c0_11, %c0_12], %13 {strides = array<i32>} : memref<16x96xf32, #tpu.memory_space<vmem>>, vector<16x96xf32>,
    } else {
    }
    %c0 = arith.constant 0 : index
    %c0_1 = arith.constant 0 : index
    %3 = vector.load %arg6[%c0, %c0_1] : memref<16x96xf32, #tpu.memory_space<vmem>>, vector<16x96xf32>
    %c0_2 = arith.constant 0 : index
    %c0_3 = arith.constant 0 : index
    %4 = vector.load %arg3[%c0_2, %c0_3] : memref<16x32xf32, #tpu.memory_space<vmem>>, vector<16x32xf32>
    %5 = arith.truncf %4 : vector<16x32xf32> to vector<16x32xbf16>
    %c0_4 = arith.constant 0 : index
    %c0_5 = arith.constant 0 : index
    %6 = vector.load %arg4[%c0_4, %c0_5] : memref<32x96xbf16, #tpu.memory_space<vmem>>, vector<32x96xbf16>
    %cst = arith.constant dense<0.000000e+00> : vector<16x96xf32>
    %7 = tpu.matmul %5, %6, %cst {dimension_numbers = #tpu.dot_dimension_numbers<[1], [0], [0], [1], [0, 0, 1, 1], [], []>} : vector<16x32xbf16>, vector<32x96xbf16>, vector<16x96xf32> -> vector<16x96xf32>
    %8 = arith.addf %3, %7 : vector<16x96xf32>
    %c0_6 = arith.constant 0 : index
    %c0_7 = arith.constant 0 : index
    %9 = vector.load %arg6[%c0_6, %c0_7] : memref<16x96xf32, #tpu.memory_space<vmem>>, vector<16x96xf32>
    tpu.vector_store %arg6[%c0_6, %c0_7], %8 {strides = array<i32>} : memref<16x96xf32, #tpu.memory_space<vmem>>, vector<16x96xf32>,
    %c0_i32_8 = arith.constant 0 : i32
    %10 = arith.cmpi eq, %arg2, %c0_i32_8 : i32
    %11 = arith.extui %10 : i1 to i32
    %c0_i32_9 = arith.constant 0 : i32
    %12 = arith.cmpi ne, %11, %c0_i32_9 : i32
    scf.if %12 {
      %c0_10 = arith.constant 0 : index
      %c0_11 = arith.constant 0 : index
      %13 = vector.load %arg6[%c0_10, %c0_11] : memref<16x96xf32, #tpu.memory_space<vmem>>, vector<16x96xf32>
      %c0_12 = arith.constant 0 : index
      %c0_13 = arith.constant 0 : index
      %14 = vector.load %arg5[%c0_12, %c0_13] : memref<16x96xf32, #tpu.memory_space<vmem>>, vector<16x96xf32>
      tpu.vector_store %arg5[%c0_12, %c0_13], %13 {strides = array<i32>} : memref<16x96xf32, #tpu.memory_space<vmem>>, vector<16x96xf32>,
    } else {
    }
    return
  }
  func.func @transform_0(%arg0: i32, %arg1: i32, %arg2: i32) -> (i32, i32) {
    %c0_i32 = arith.constant 0 : i32
    return %arg0, %arg2 : i32, i32
  }
  func.func @transform_1(%arg0: i32, %arg1: i32, %arg2: i32) -> (i32, i32) {
    %c0_i32 = arith.constant 0 : i32
    return %arg2, %arg1 : i32, i32
  }
  func.func @transform_2(%arg0: i32, %arg1: i32, %arg2: i32) -> (i32, i32) {
    %c0_i32 = arith.constant 0 : i32
    return %arg0, %arg1 : i32, i32
  }
}

</mosaic_0001>

<llo_original>
// kernel: tpu_custom_call.1
$region0: #{tpu_custom_call.1}
  #allocation0 [shape = 'u32[]', space=smem, size = 0x4, offset = 0x4, fixed_abs, tag = 'smem constant byte address 0x4 - core index']
  #allocation1 [shape = 'u32[144,128]{1,0:T(1,128)}', space=vmem, size = 0x12000, scoped, tag = 'internal scratch']
  #allocation2 [shape = 'f32[16,96]{1,0:T(8,128)}', space=vmem, size = 0x2000, scoped, tag = 'scratch operand']
  %s0 = inlined_call_operand.hbm [shape: f32[16,32], index: 0, kind: input, shape index: {}]
  %s1 = inlined_call_operand.hbm [shape: bf16[32,96], index: 1, kind: input, shape index: {}]
  %s2 = inlined_call_operand.hbm [shape: f32[16,96], index: 2, kind: output, shape index: {}]
  %s3 = sld [smem:[#allocation0]]
  $region34: #{tpu_custom_call.1} parent=0
    _
  %s5 = ssub.s32 1, %s3
  %s6 = scalar_select 0, %s5, %s3
  $region1: #{tpu_custom_call.1} parent=0
    #allocation3 [shape = 'u8[8192]{0}', space=vmem, size = 0x2000, scoped, tag = 'input window, operand 0, single buffered']
    #allocation4 [shape = 's32[1]{0}', space=sflag, size = 0x4, scoped, tag = 'scoped memory for tpu_custom_call.1']
    #allocation5 [shape = 's32[1]{0}', space=sflag, size = 0x4, scoped, tag = 'scoped memory for tpu_custom_call.1']
    #allocation6 [shape = 'u8[8192]{0}', space=vmem, size = 0x2000, scoped, tag = 'input window, operand 1, single buffered']
    #allocation7 [shape = 's32[1]{0}', space=sflag, size = 0x4, scoped, tag = 'scoped memory for tpu_custom_call.1']
    #allocation8 [shape = 'u8[8192]{0}', space=vmem, size = 0x2000, scoped, tag = 'output window, operand 0, single buffered']
    %7 = vsyncpa [#allocation4], 0
    %8 = vsyncpa [#allocation7], 0
    %9 = vsyncpa [#allocation5], 0
    // Predicated region
    $region2: #{tpu_custom_call.1} parent=1 // pred_check
      _
    $region3: #{tpu_custom_call.1} parent=1 // pred_check_branch
      %11 = sbr.rel (0) target = $region5
    $region4: #{tpu_custom_call.1} parent=1 // pred_region
      %s13 = ssub.s32 256, 256
      %14 = vsyncadd [#allocation4], %s13
      %s15 = sshll.u32 [#allocation3], 4
      %s16 = int_to_ptr.vmem [resolvable:$true] %s15
      %21 = dma.hbm_to_vmem [thread:$0]  %s0, 256, %s16, [#allocation4], 128, 128, 8
    $region5: #{tpu_custom_call.1} parent=1 // pred_fallthru
      _
    // Predicated region
    $region6: #{tpu_custom_call.1} parent=1 // pred_check
      _
    $region7: #{tpu_custom_call.1} parent=1 // pred_check_branch
      %23 = sbr.rel (0) target = $region9
    $region8: #{tpu_custom_call.1} parent=1 // pred_region
      %s25 = ssub.s32 256, 256
      %26 = vsyncadd [#allocation7], %s25
      %s27 = sshll.u32 [#allocation6], 4
      %s28 = int_to_ptr.vmem [resolvable:$true] %s27
      %33 = dma.hbm_to_vmem [thread:$0]  %s1, 256, %s28, [#allocation7], 64, 64, 4
    $region9: #{tpu_custom_call.1} parent=1 // pred_fallthru
      _
    // Predicated region
    $region10: #{tpu_custom_call.1} parent=1 // pred_check
      _
    $region11: #{tpu_custom_call.1} parent=1 // pred_check_branch
      %35 = sbr.rel (0) target = $region13
    $region12: #{tpu_custom_call.1} parent=1 // pred_region
      %36 = dma.done [#allocation4], 256
    $region13: #{tpu_custom_call.1} parent=1 // pred_fallthru
      _
    // Predicated region
    $region14: #{tpu_custom_call.1} parent=1 // pred_check
      _
    $region15: #{tpu_custom_call.1} parent=1 // pred_check_branch
      %38 = sbr.rel (0) target = $region17
    $region16: #{tpu_custom_call.1} parent=1 // pred_region
      %39 = dma.done [#allocation7], 256
    $region17: #{tpu_custom_call.1} parent=1 // pred_fallthru
      _
    %p41 = scmp.eq.s32.totalorder 0, 0
    // Predicated region
    $region18: #{tpu_custom_call.1} parent=1 // pred_check
      %p42 = pneg %p41
    $region19: #{tpu_custom_call.1} parent=1 // pred_check_branch
      %44 = sbr.rel (%p42) target = $region21
    $region20: #{tpu_custom_call.1} parent=1 // pred_region
      %vm45 = vcmask 785408
      %46 = vst.msk [vmem:[#allocation2] sm:$0xff] %vm45, 0.0
      %47 = vst.msk [vmem:[#allocation2 + $0x8] sm:$0xff] %vm45, 0.0
    $region21: #{tpu_custom_call.1} parent=1 // pred_fallthru
      _
    %v48 = vld [vmem:[#allocation2] sm:$0xff]
    %v49 = vld [vmem:[#allocation2 + $0x8] sm:$0xff]
    %v50 = vld [vmem:[#allocation3] sm:$0xff]
    %v51 = vld [vmem:[#allocation3 + $0x8] sm:$0xff]
    %v52 = vpack.c.bf16 %v51, %v50
    %v53 = vld [vmem:[#allocation6] sm:$0xf]
    %v54 = vld [vmem:[#allocation6 + $0x4] sm:$0xf]
    %v55 = vld [vmem:[#allocation6 + $0x8] sm:$0xf]
    %v56 = vld [vmem:[#allocation6 + $0xc] sm:$0xf]
    %v61 = vunpack.c.l.b16 %v53
    %v62 = vunpack.c.l.b16 %v54
    %v63 = vunpack.c.l.b16 %v55
    %v64 = vunpack.c.l.b16 %v56
    %v65 = vpack.c.b16 %v62, %v61
    %v66 = vpack.c.b16 %v64, %v63
    %vm69 = vcmask 261120
    %v71 = vsel %vm69, %v52, 0
    %73 = vmatprep.subr.bf16.mxu0 0
    %74 = vmatpush1.bf16.msra.mxu0 0
    %75 = vmatprep.subr.bf16.mxu0 0
    %76 = vmatpush1.bf16.msra.mxu0 0
    %77 = vmatprep.subr.bf16.mxu0 0
    %78 = vmatpush1.bf16.msra.mxu0 0
    %79 = vmatprep.subr.bf16.mxu0 0
    %80 = vmatpush1.bf16.msra.mxu0 0
    %81 = vmatprep.subr.bf16.mxu0 0
    %82 = vmatpush1.bf16.msra.mxu0 0
    %83 = vmatprep.subr.bf16.mxu0 0
    %84 = vmatpush1.bf16.msra.mxu0 0
    %85 = vmatprep.subr.bf16.mxu0 0
    %86 = vmatpush1.bf16.msra.mxu0 %v66
    %87 = vmatprep.subr.bf16.mxu0 0
    %88 = vmatpush1.bf16.msra.mxu0 %v65
    %89 = vmatprep.subr.bf16.mxu0 0
    %90 = vmatpush2.bf16.msra.mxu0 0
    %91 = vmatprep.subr.bf16.mxu0 0
    %92 = vmatpush2.bf16.msra.mxu0 0
    %93 = vmatprep.subr.bf16.mxu0 0
    %94 = vmatpush2.bf16.msra.mxu0 0
    %95 = vmatprep.subr.bf16.mxu0 0
    %96 = vmatpush2.bf16.msra.mxu0 0
    %97 = vmatprep.subr.bf16.mxu0 0
    %98 = vmatpush2.bf16.msra.mxu0 0
    %99 = vmatprep.subr.bf16.mxu0 0
    %100 = vmatpush2.bf16.msra.mxu0 0
    %101 = vmatprep.subr.bf16.mxu0 0
    %102 = vmatpush2.bf16.msra.mxu0 0
    %103 = vmatprep.subr.bf16.mxu0 0
    %104 = vmatpush2.bf16.msra.mxu0 0
    %105 = vmatprep.mubr.bf16.mxu0 0
    %106 = vmatmul.mubr.bf16.gmra.mxu0 %v71
    %v107 = vpop.f32.mrf.mxu0
    %v108 = vadd.f32 0.0, %v107
    %v109 = vpop.f32.mrf.mxu0
    %v110 = vpop.f32.mrf.mxu0
    %v111 = vadd.f32 0.0, %v110
    %v112 = vpop.f32.mrf.mxu0
    %113 = vdwg.mxu0
    %v114 = vadd.f32 %v48, %v108
    %v115 = vadd.f32 %v49, %v111
    %vm116 = vcmask 785408
    %117 = vst.msk [vmem:[#allocation2] sm:$0xff] %vm116, %v114
    %118 = vst.msk [vmem:[#allocation2 + $0x8] sm:$0xff] %vm116, %v115
    // Predicated region
    $region22: #{tpu_custom_call.1} parent=1 // pred_check
      %p119 = pneg %p41
    $region23: #{tpu_custom_call.1} parent=1 // pred_check_branch
      %121 = sbr.rel (%p119) target = $region25
    $region24: #{tpu_custom_call.1} parent=1 // pred_region
      %v122 = vld [vmem:[#allocation2] sm:$0xff]
      %v123 = vld [vmem:[#allocation2 + $0x8] sm:$0xff]
      %124 = vst.msk [vmem:[#allocation8] sm:$0xff] %vm116, %v122
      %125 = vst.msk [vmem:[#allocation8 + $0x8] sm:$0xff] %vm116, %v123
    $region25: #{tpu_custom_call.1} parent=1 // pred_fallthru
      _
    // Predicated region
    $region26: #{tpu_custom_call.1} parent=1 // pred_check
      _
    $region27: #{tpu_custom_call.1} parent=1 // pred_check_branch
      %127 = sbr.rel (0) target = $region29
    $region28: #{tpu_custom_call.1} parent=1 // pred_region
      %s129 = ssub.s32 256, 256
      %130 = vsyncadd [#allocation5], %s129
      %s131 = sshll.u32 [#allocation8], 4
      %s132 = int_to_ptr.vmem [resolvable:$true] %s131
      %137 = dma.vmem_to_hbm [thread:$0]  %s132, 256, %s2, [#allocation5], 128, 128, 8
    $region29: #{tpu_custom_call.1} parent=1 // pred_fallthru
      _
    // Predicated region
    $region30: #{tpu_custom_call.1} parent=1 // pred_check
      _
    $region31: #{tpu_custom_call.1} parent=1 // pred_check_branch
      %139 = sbr.rel (0) target = $region33
    $region32: #{tpu_custom_call.1} parent=1 // pred_region
      %140 = dma.done [#allocation5], 256
    $region33: #{tpu_custom_call.1} parent=1 // pred_fallthru
      _
    %141 = vsyncpa [#allocation4], 1
    %142 = vsyncpa [#allocation7], 1
    %143 = vsyncpa [#allocation5], 1

</llo_original>
